<compile_context>
chip_gen: v5e
topology: v5e:2x2
jax: 0.10.0
libtpu: 0.0.40
codegen_flags: <defaults>
</compile_context>

<pallas_src>
import functools

import numpy as np
import jax
import jax.numpy as jnp
from jax.experimental import pallas as pl
from jax.experimental.pallas import tpu as pltpu


_TILE_S_MAX = 2048            # spatial (lane-axis) tile; multiple of 128
_TARGET_M_ROWS = 256          # target MXU M rows per block (fills v6e/v7x; fine on v5e)
_W_SINGLE_BUF_BYTES = 4 << 20  # single-buffer the resident fc weight above this size


def _round_up(n, m):
    return ((n + m - 1) // m) * m


def _choose_tiles(S):
    """(tile_s, s_pad): tile_s = largest multiple of 128 that divides
    round_up(S, 128) and is <= _TILE_S_MAX, so the wrapper never pads x by more
    than 127 trailing elements (none when S is a multiple of 128)."""
    s_pad = _round_up(S, 128)
    tile_s = 128
    t = 128
    while t <= min(s_pad, _TILE_S_MAX):
        if s_pad % t == 0:
            tile_s = t
        t += 128
    return tile_s, s_pad


def _choose_batch_tile(B, C):
    """Batch elements per M-block.  Constraints (no padding copy of x needed and
    every BlockSpec obeys the (8, 128) rule):
      - bt divides B
      - bt*C (x-block sublane dim) is a multiple of 8, or bt == B (full dim)
      - bt   (out-block sublane dim) is a multiple of 8, or bt == B
      - bt*C <= _TARGET_M_ROWS when possible (128/256 MXU rows; >=2 blocks lets
        v7x's two TensorCores share the parallel axis)
    """
    best = B
    for bt in range(1, B + 1):
        if B % bt:
            continue
        if bt * C > _TARGET_M_ROWS:
            continue
        rows_ok = (bt * C) % 8 == 0 or bt == B
        out_ok = bt % 8 == 0 or bt == B
        if rows_ok and out_ok:
            best = bt
    return best


# ------------------------- Pallas kernel -------------------------


def _dvpp_kernel(x_ref, p_ref, w_ref, b_ref, o_ref, acc_ref):
    """Fused pyramid pooling + fc for a tile of b_tile batch elements.

    x_ref  : (M_TILE, TS)   rows are (batch, channel) pairs: row = b_local*C + c
    p_ref  : (TS, 128)      averaging-matrix tile (cols 73..127 are zero padding)
    w_ref  : (C, 128, EP)   fc weight, internal (c, pooled-k) order, zero padded
    b_ref  : (1, EP)        fc bias (zero padded)
    o_ref  : (b_tile, EP)   output rows for this batch tile (lane/sublane dense)
    acc_ref: (M_TILE, 128)  f32 pooled-feature accumulator, resident across k steps
    """
    k = pl.program_id(1)

    @pl.when(k == 0)
    def _init():
        acc_ref[...] = jnp.zeros_like(acc_ref)

    # All three adaptive avg-pools at once: (M_TILE, TS) @ (TS, 128) on the MXU.
    acc_ref[...] += jnp.dot(x_ref[...], p_ref[...],
                            preferred_element_type=jnp.float32)

    @pl.when(k == pl.num_programs(1) - 1)
    def _finalize():
        C = w_ref.shape[0]
        bt, ep = o_ref.shape
        out = jnp.zeros((bt, ep), dtype=jnp.float32)
        # Fused fc: out[b, e] = bias[e] + sum_c sum_j acc[b*C + c, j] * w[c, j, e].
        # One (bt, 128) @ (128, EP) MXU matmul per channel; channel-c rows of the
        # accumulator are gathered with a static sublane-strided read.
        for c in range(C):
            rows_c = acc_ref[pl.ds(c, bt, stride=C), :]
            out = out + jnp.dot(rows_c, w_ref[c],
                                preferred_element_type=jnp.float32)
        o_ref[...] = (out + b_ref[...]).astype(o_ref.dtype)


# ------------------------- wrapper -------------------------


@functools.partial(jax.jit, static_argnames=("embed_dim",))
def dvpp3d_forward(x, pool_mat_pad, w3, bias2d, *, embed_dim):
    """x: (B, C, D, H, W) (any float dtype). Returns (B, embed_dim) float32."""
    B, C, D, H, W = x.shape
    S = D * H * W
    tile_s, s_pad = _choose_tiles(S)
    assert pool_mat_pad.shape == (s_pad, 128), "pool matrix built for a different shape"
    EP = w3.shape[2]
    assert w3.shape == (C, 128, EP) and bias2d.shape == (1, EP)

    bt = _choose_batch_tile(B, C)
    m_tile = bt * C
    n_m = B // bt
    n_k = s_pad // tile_s

    # Free row-major reshape; x keeps its native dtype (no astype copy in HBM).
    x2 = x.reshape(B * C, S)
    if s_pad != S:
        # <= 127 trailing zeros; pool-matrix rows past S are zero, so this is exact
        # and keeps the last spatial block's contents defined.
        x2 = jnp.pad(x2, ((0, 0), (0, s_pad - S)))

    x_bytes = jnp.dtype(x.dtype).itemsize
    w_bytes = C * 128 * EP * 4

    cost = pl.CostEstimate(
        flops=2 * B * C * s_pad * 128 + 2 * B * C * 128 * EP,
        transcendentals=0,
        bytes_accessed=(B * C * s_pad * x_bytes           # x: one pass
                        + n_m * n_k * tile_s * 128 * 4    # pool matrix: once per M block
                        + w_bytes + EP * 4                # fc weight + bias
                        + B * EP * 4),                    # output
    )

    # Single-buffer the grid-invariant fc weight only when it is big enough to
    # matter for VMEM (production-sized C*EP); tiny weights keep the default pipeline.
    w_kwargs = {"pipeline_mode": pl.Buffered(1)} if w_bytes >= _W_SINGLE_BUF_BYTES else {}

    vmem_need = (2 * m_tile * tile_s * x_bytes      # x blocks (double-buffered)
                 + 2 * tile_s * 128 * 4             # pool blocks (double-buffered)
                 + (1 if w_kwargs else 2) * w_bytes  # fc weight
                 + 2 * 8 * EP * 4                   # bias (padded)
                 + 2 * max(bt, 8) * EP * 4          # out blocks
                 + m_tile * 128 * 4)                # accumulator scratch
    vmem_limit = int(min(max(2 * vmem_need, 32 << 20), 64 << 20))

    out = pl.pallas_call(
        _dvpp_kernel,
        out_shape=jax.ShapeDtypeStruct((B, EP), jnp.float32),
        grid=(n_m, n_k),
        in_specs=[
            pl.BlockSpec((m_tile, tile_s), lambda m, k: (m, k)),            # x rows
            pl.BlockSpec((tile_s, 128), lambda m, k: (k, 0)),               # pool matrix
            pl.BlockSpec((C, 128, EP), lambda m, k: (0, 0, 0), **w_kwargs),  # fc weight
            pl.BlockSpec((1, EP), lambda m, k: (0, 0)),                     # fc bias
        ],
        out_specs=pl.BlockSpec((bt, EP), lambda m, k: (m, 0)),
        scratch_shapes=[pltpu.VMEM((m_tile, 128), jnp.float32)],
        compiler_params=pltpu.CompilerParams(
            dimension_semantics=("parallel", "arbitrary"),
            vmem_limit_bytes=vmem_limit),
        cost_estimate=cost,
    )(x2, pool_mat_pad, w3, bias2d)

    return out[:, :embed_dim]


# ------------------------- parameter setup (host side) -------------------------


def _adaptive_bins(n_in, n_out):
    """PyTorch AdaptiveAvgPool bin boundaries: [floor(i*n/o), ceil((i+1)*n/o))."""
    i = np.arange(n_out)
    starts = (i * n_in) // n_out
    ends = -((-(i + 1) * n_in) // n_out)
    return starts, ends


def _make_pool_matrix(D, H, W):
    """(S, 73) averaging matrix: col 0 = global mean, cols 1..8 = 2x2x2 adaptive bins,
    cols 9..72 = 4x4x4 adaptive bins. Exact for any (D, H, W)."""
    S = D * H * W
    P = np.zeros((S, 73), dtype=np.float32)
    P[:, 0] = 1.0 / S
    for n_bins, base in ((2, 1), (4, 9)):
        sd, ed = _adaptive_bins(D, n_bins)
        sh, eh = _adaptive_bins(H, n_bins)
        sw, ew = _adaptive_bins(W, n_bins)
        for od in range(n_bins):
            for oh in range(n_bins):
                for ow in range(n_bins):
                    cnt = (ed[od] - sd[od]) * (eh[oh] - sh[oh]) * (ew[ow] - sw[ow])
                    box = np.zeros((D, H, W), dtype=np.float32)
                    box[sd[od]:ed[od], sh[oh]:eh[oh], sw[ow]:ew[ow]] = 1.0 / cnt
                    P[:, base + (od * n_bins + oh) * n_bins + ow] = box.reshape(-1)
    return P


def _perm_internal_to_torch(C):
    """Internal feature index j = c*73 + k  ->  index in torch.cat([p1, p2, p3])."""
    perm = np.zeros(C * 73, dtype=np.int64)
    for c in range(C):
        for k in range(73):
            j = c * 73 + k
            if k == 0:
                perm[j] = c
            elif k <= 8:
                perm[j] = C + c * 8 + (k - 1)
            else:
                perm[j] = 9 * C + c * 64 + (k - 9)
    return perm


def make_dvpp3d_params(w_pt, b_pt, C, D, H, W):
    """PyTorch-layout fc params (weight (E, C*73), bias (E,)) -> kernel-ready arrays:
    padded averaging matrix (S_pad, 128), permuted/padded fc weight (C, 128, EP),
    padded bias (1, EP)."""
    E = w_pt.shape[0]
    EP = _round_up(E, 128)
    S = D * H * W
    _, s_pad = _choose_tiles(S)

    P = _make_pool_matrix(D, H, W)
    P_pad = np.zeros((s_pad, 128), dtype=np.float32)
    P_pad[:S, :73] = P

    perm = _perm_internal_to_torch(C)
    w_internal = np.asarray(w_pt).T[perm, :]            # (C*73, E), internal order
    w3 = np.zeros((C, 128, EP), dtype=np.float32)
    w3[:, :73, :E] = w_internal.reshape(C, 73, E)

    bias2d = np.zeros((1, EP), dtype=np.float32)
    bias2d[0, :E] = np.asarray(b_pt)

    return jnp.asarray(P_pad), jnp.asarray(w3), jnp.asarray(bias2d)


# ------------------------- reference & test -------------------------


def _reference(x, w_pt, b_pt):
    """Pure-JAX replica of the PyTorch forward (D, H, W divisible by 4)."""
    B, C, D, H, W = x.shape
    p1 = x.mean(axis=(2, 3, 4)).reshape(B, C)
    p2 = (x.reshape(B, C, 2, D // 2, 2, H // 2, 2, W // 2)
            .mean(axis=(3, 5, 7)).reshape(B, C * 8))
    p3 = (x.reshape(B, C, 4, D // 4, 4, H // 4, 4, W // 4)
            .mean(axis=(3, 5, 7)).reshape(B, C * 64))
    cat = jnp.concatenate([p1, p2, p3], axis=1)
    return jnp.dot(cat, w_pt.T, precision=jax.lax.Precision.HIGHEST) + b_pt


if __name__ == "__main__":
    B, C, D, H, W = 2, 4, 16, 16, 16
    embed_dim = 32

    key = jax.random.PRNGKey(0)
    kx, kw, kb = jax.random.split(key, 3)

    x = jax.random.normal(kx, (B, C, D, H, W), dtype=jnp.float32)

    # Deterministic "PyTorch-layout" fc parameters: weight (E, C*73), bias (E,)
    in_features = C * (1 + 8 + 64)
    w_pt = 0.02 * jax.random.normal(kw, (embed_dim, in_features), dtype=jnp.float32)
    b_pt = 0.01 * jax.random.normal(kb, (embed_dim,), dtype=jnp.float32)

    pool_mat_pad, w3, bias2d = make_dvpp3d_params(w_pt, b_pt, C, D, H, W)

    out = dvpp3d_forward(x, pool_mat_pad, w3, bias2d, embed_dim=embed_dim)
    out = jax.block_until_ready(out)

    ref = _reference(x, w_pt, b_pt)
    np.testing.assert_allclose(np.asarray(out), np.asarray(ref), rtol=1e-4, atol=5e-5)

    print("KERNEL_OK")
</pallas_src>

<mosaic_0001>
module attributes {stable_mosaic.version = 11 : i64} {
  func.func @_dvpp_kernel(%arg0: i32, %arg1: i32, %arg2: memref<8x2048xf32, #tpu.memory_space<vmem>>, %arg3: memref<2048x128xf32, #tpu.memory_space<vmem>>, %arg4: memref<4x128x128xf32, #tpu.memory_space<vmem>>, %arg5: memref<1x128xf32, #tpu.memory_space<vmem>>, %arg6: memref<2x128xf32, #tpu.memory_space<vmem>>, %arg7: memref<8x128xf32, #tpu.memory_space<vmem>>) attributes {dimension_semantics = [#tpu.dimension_semantics<parallel>, #tpu.dimension_semantics<arbitrary>], iteration_bounds = array<i64: 1, 2>, scalar_prefetch = 0 : i64, scratch_operands = 1 : i64, tpu.core_type = #tpu.core_type<tc>, window_params = [{transform_indices = @transform_0, window_bounds = array<i64: 8, 2048>}, {transform_indices = @transform_1, window_bounds = array<i64: 2048, 128>}, {pipeline_mode = #tpu.pipeline_mode<synchronous>, transform_indices = @transform_2, window_bounds = array<i64: 4, 128, 128>}, {pipeline_mode = #tpu.pipeline_mode<synchronous>, transform_indices = @transform_3, window_bounds = array<i64: 1, 128>}, {transform_indices = @transform_4, window_bounds = array<i64: 2, 128>}]} {
    %c0_i32 = arith.constant 0 : i32
    %0 = arith.cmpi eq, %arg1, %c0_i32 : i32
    %1 = arith.extui %0 : i1 to i32
    %c0_i32_0 = arith.constant 0 : i32
    %2 = arith.cmpi ne, %1, %c0_i32_0 : i32
    scf.if %2 {
      %cst_9 = arith.constant 0.000000e+00 : f32
      %12 = vector.broadcast %cst_9 : f32 to vector<8x128xf32>
      %c0_10 = arith.constant 0 : index
      %c0_11 = arith.constant 0 : index
      %13 = vector.load %arg7[%c0_10, %c0_11] : memref<8x128xf32, #tpu.memory_space<vmem>>, vector<8x128xf32>
      tpu.vector_store %arg7[%c0_10, %c0_11], %12 {strides = array<i32>} : memref<8x128xf32, #tpu.memory_space<vmem>>, vector<8x128xf32>,
    } else {
    }
    %c0 = arith.constant 0 : index
    %c0_1 = arith.constant 0 : index
    %3 = vector.load %arg7[%c0, %c0_1] : memref<8x128xf32, #tpu.memory_space<vmem>>, vector<8x128xf32>
    %c0_2 = arith.constant 0 : index
    %c0_3 = arith.constant 0 : index
    %4 = vector.load %arg2[%c0_2, %c0_3] : memref<8x2048xf32, #tpu.memory_space<vmem>>, vector<8x2048xf32>
    %c0_4 = arith.constant 0 : index
    %c0_5 = arith.constant 0 : index
    %5 = vector.load %arg3[%c0_4, %c0_5] : memref<2048x128xf32, #tpu.memory_space<vmem>>, vector<2048x128xf32>
    %cst = arith.constant dense<0.000000e+00> : vector<8x128xf32>
    %6 = tpu.matmul %4, %5, %cst {dimension_numbers = #tpu.dot_dimension_numbers<[1], [0], [0], [1], [0, 0, 1, 1], [], []>} : vector<8x2048xf32>, vector<2048x128xf32>, vector<8x128xf32> -> vector<8x128xf32>
    %7 = arith.addf %3, %6 : vector<8x128xf32>
    %c0_6 = arith.constant 0 : index
    %c0_7 = arith.constant 0 : index
    %8 = vector.load %arg7[%c0_6, %c0_7] : memref<8x128xf32, #tpu.memory_space<vmem>>, vector<8x128xf32>
    tpu.vector_store %arg7[%c0_6, %c0_7], %7 {strides = array<i32>} : memref<8x128xf32, #tpu.memory_space<vmem>>, vector<8x128xf32>,
    %c1_i32 = arith.constant 1 : i32
    %9 = arith.cmpi eq, %arg1, %c1_i32 : i32
    %10 = arith.extui %9 : i1 to i32
    %c0_i32_8 = arith.constant 0 : i32
    %11 = arith.cmpi ne, %10, %c0_i32_8 : i32
    scf.if %11 {
      %cst_9 = arith.constant 0.000000e+00 : f32
      %12 = vector.broadcast %cst_9 : f32 to vector<2x128xf32>
      %c0_10 = arith.constant 0 : index
      %c0_11 = arith.constant 0 : index
      %13 = tpu.strided_load %arg7[%c0_10, %c0_11] {strides = array<i32: 4, 1>} : memref<8x128xf32, #tpu.memory_space<vmem>>, vector<2x128xf32>
      %c0_12 = arith.constant 0 : index
      %c0_13 = arith.constant 0 : index
      %c0_14 = arith.constant 0 : index
      %14 = vector.load %arg4[%c0_12, %c0_13, %c0_14] : memref<4x128x128xf32, #tpu.memory_space<vmem>>, vector<1x128x128xf32>
      %15 = vector.shape_cast %14 : vector<1x128x128xf32> to vector<128x128xf32>
      %cst_15 = arith.constant dense<0.000000e+00> : vector<2x128xf32>
      %16 = tpu.matmul %13, %15, %cst_15 {dimension_numbers = #tpu.dot_dimension_numbers<[1], [0], [0], [1], [0, 0, 1, 1], [], []>} : vector<2x128xf32>, vector<128x128xf32>, vector<2x128xf32> -> vector<2x128xf32>
      %17 = arith.addf %12, %16 : vector<2x128xf32>
      %c1 = arith.constant 1 : index
      %c0_16 = arith.constant 0 : index
      %18 = tpu.strided_load %arg7[%c1, %c0_16] {strides = array<i32: 4, 1>} : memref<8x128xf32, #tpu.memory_space<vmem>>, vector<2x128xf32>
      %c1_17 = arith.constant 1 : index
      %c0_18 = arith.constant 0 : index
      %c0_19 = arith.constant 0 : index
      %19 = vector.load %arg4[%c1_17, %c0_18, %c0_19] : memref<4x128x128xf32, #tpu.memory_space<vmem>>, vector<1x128x128xf32>
      %20 = vector.shape_cast %19 : vector<1x128x128xf32> to vector<128x128xf32>
      %cst_20 = arith.constant dense<0.000000e+00> : vector<2x128xf32>
      %21 = tpu.matmul %18, %20, %cst_20 {dimension_numbers = #tpu.dot_dimension_numbers<[1], [0], [0], [1], [0, 0, 1, 1], [], []>} : vector<2x128xf32>, vector<128x128xf32>, vector<2x128xf32> -> vector<2x128xf32>
      %22 = arith.addf %17, %21 : vector<2x128xf32>
      %c2 = arith.constant 2 : index
      %c0_21 = arith.constant 0 : index
      %23 = tpu.strided_load %arg7[%c2, %c0_21] {strides = array<i32: 4, 1>} : memref<8x128xf32, #tpu.memory_space<vmem>>, vector<2x128xf32>
      %c2_22 = arith.constant 2 : index
      %c0_23 = arith.constant 0 : index
      %c0_24 = arith.constant 0 : index
      %24 = vector.load %arg4[%c2_22, %c0_23, %c0_24] : memref<4x128x128xf32, #tpu.memory_space<vmem>>, vector<1x128x128xf32>
      %25 = vector.shape_cast %24 : vector<1x128x128xf32> to vector<128x128xf32>
      %cst_25 = arith.constant dense<0.000000e+00> : vector<2x128xf32>
      %26 = tpu.matmul %23, %25, %cst_25 {dimension_numbers = #tpu.dot_dimension_numbers<[1], [0], [0], [1], [0, 0, 1, 1], [], []>} : vector<2x128xf32>, vector<128x128xf32>, vector<2x128xf32> -> vector<2x128xf32>
      %27 = arith.addf %22, %26 : vector<2x128xf32>
      %c3 = arith.constant 3 : index
      %c0_26 = arith.constant 0 : index
      %28 = tpu.strided_load %arg7[%c3, %c0_26] {strides = array<i32: 4, 1>} : memref<8x128xf32, #tpu.memory_space<vmem>>, vector<2x128xf32>
      %c3_27 = arith.constant 3 : index
      %c0_28 = arith.constant 0 : index
      %c0_29 = arith.constant 0 : index
      %29 = vector.load %arg4[%c3_27, %c0_28, %c0_29] : memref<4x128x128xf32, #tpu.memory_space<vmem>>, vector<1x128x128xf32>
      %30 = vector.shape_cast %29 : vector<1x128x128xf32> to vector<128x128xf32>
      %cst_30 = arith.constant dense<0.000000e+00> : vector<2x128xf32>
      %31 = tpu.matmul %28, %30, %cst_30 {dimension_numbers = #tpu.dot_dimension_numbers<[1], [0], [0], [1], [0, 0, 1, 1], [], []>} : vector<2x128xf32>, vector<128x128xf32>, vector<2x128xf32> -> vector<2x128xf32>
      %32 = arith.addf %27, %31 : vector<2x128xf32>
      %c0_31 = arith.constant 0 : index
      %c0_32 = arith.constant 0 : index
      %33 = vector.load %arg5[%c0_31, %c0_32] : memref<1x128xf32, #tpu.memory_space<vmem>>, vector<1x128xf32>
      %34 = vector.broadcast %33 : vector<1x128xf32> to vector<2x128xf32>
      %35 = arith.addf %32, %34 : vector<2x128xf32>
      %c0_33 = arith.constant 0 : index
      %c0_34 = arith.constant 0 : index
      %36 = vector.load %arg6[%c0_33, %c0_34] : memref<2x128xf32, #tpu.memory_space<vmem>>, vector<2x128xf32>
      tpu.vector_store %arg6[%c0_33, %c0_34], %35 {strides = array<i32>} : memref<2x128xf32, #tpu.memory_space<vmem>>, vector<2x128xf32>,
    } else {
    }
    return
  }
  func.func @transform_0(%arg0: i32, %arg1: i32) -> (i32, i32) {
    %c0_i32 = arith.constant 0 : i32
    return %arg0, %arg1 : i32, i32
  }
  func.func @transform_1(%arg0: i32, %arg1: i32) -> (i32, i32) {
    %c0_i32 = arith.constant 0 : i32
    %c0_i32_0 = arith.constant 0 : i32
    return %arg1, %c0_i32 : i32, i32
  }
  func.func @transform_2(%arg0: i32, %arg1: i32) -> (i32, i32, i32) {
    %c0_i32 = arith.constant 0 : i32
    %c0_i32_0 = arith.constant 0 : i32
    %c0_i32_1 = arith.constant 0 : i32
    %c0_i32_2 = arith.constant 0 : i32
    return %c0_i32, %c0_i32_0, %c0_i32_1 : i32, i32, i32
  }
  func.func @transform_3(%arg0: i32, %arg1: i32) -> (i32, i32) {
    %c0_i32 = arith.constant 0 : i32
    %c0_i32_0 = arith.constant 0 : i32
    %c0_i32_1 = arith.constant 0 : i32
    return %c0_i32, %c0_i32_0 : i32, i32
  }
  func.func @transform_4(%arg0: i32, %arg1: i32) -> (i32, i32) {
    %c0_i32 = arith.constant 0 : i32
    %c0_i32_0 = arith.constant 0 : i32
    return %arg0, %c0_i32 : i32, i32
  }
}

</mosaic_0001>

<llo_original>
// kernel: dvpp3d_forward.1
$region0: #{dvpp3d_forward.1}
  #allocation0 [shape = 'u32[]', space=smem, size = 0x4, offset = 0x4, fixed_abs, tag = 'smem constant byte address 0x4 - core index']
  #allocation1 [shape = 'u32[72,128]{1,0:T(1,128)}', space=vmem, size = 0x9000, scoped, tag = 'internal scratch']
  #allocation2 [shape = 'f32[8,128]{1,0:T(8,128)}', space=vmem, size = 0x1000, scoped, tag = 'scratch operand']
  %s0 = inlined_call_operand.vmem [shape: f32[8,4096], index: 0, kind: input, shape index: {}]
  %s1 = inlined_call_operand.hbm [shape: f32[4096,128], index: 1, kind: input, shape index: {}]
  %s2 = inlined_call_operand.hbm [shape: f32[4,128,128], index: 2, kind: input, shape index: {}]
  %s3 = inlined_call_operand.hbm [shape: f32[1,128], index: 3, kind: input, shape index: {}]
  %s4 = inlined_call_operand.hbm [shape: f32[2,128], index: 4, kind: output, shape index: {}]
  %s5 = sld [smem:[#allocation0]]
  $region69: #{dvpp3d_forward.1} parent=0
    _
  %s7 = ssub.s32 1, %s5
  %s8 = scalar_select 0, %s7, %s5
  $region1: #{dvpp3d_forward.1} parent=0
    #allocation3 [shape = 'u8[2097152]{0}', space=vmem, size = 0x200000, scoped, tag = 'input window, operand 1']
    #allocation4 [shape = 's32[2]{0}', space=sflag, size = 0x8, scoped, tag = 'scoped memory for dvpp3d_forward.1']
    #allocation5 [shape = 's32[2]{0}', space=sflag, size = 0x8, scoped, tag = 'scoped memory for dvpp3d_forward.1']
    #allocation6 [shape = 'u8[262144]{0}', space=vmem, size = 0x40000, scoped, tag = 'input window, operand 2, single buffered']
    #allocation7 [shape = 's32[1]{0}', space=sflag, size = 0x4, scoped, tag = 'scoped memory for dvpp3d_forward.1']
    #allocation8 [shape = 'u8[512]{0}', space=vmem, size = 0x400, scoped, tag = 'input window, operand 3, single buffered']
    #allocation9 [shape = 'u8[1024]{0}', space=vmem, size = 0x400, scoped, tag = 'output window, operand 0, single buffered']
    %9 = vsyncpa [#allocation4], 0
    %s10 = scalar_lea.sflag [#allocation4], 1
    %11 = vsyncpa %s10, 0
    %12 = vsyncpa [#allocation7], 0
    %13 = vsyncpa [#allocation5], 0
    loop: start=0, step=1, limit=4
    $region2: #{dvpp3d_forward.1} parent=1 // loop_pre_header
      _
    $region3: #{dvpp3d_forward.1} parent=1 // loop_header
      %s15 = sphi 0, %s19
      %p16 = scmp.ge.s32.totalorder %s15, 4
      %s22 = sphi 0, %s34
      %s23 = sphi 0, %s30
      %s24 = sphi 0, %s22
      %s25 = sphi 0, %s23
      %s26 = sphi 0, %s24
      %s27 = sphi 0, %s25
      %s39 = sphi 0, %s41
      %s42 = sphi 0, %s39
      %s43 = sphi 0, %s42
      %s59 = sphi 0, %s43
      %s65 = sphi 0, %s67
      %s68 = sphi 0, %s65
      %s69 = sphi 0, %s68
      %s85 = sphi 0, %s69
      %s89 = sphi 0, %s89
      %s91 = sphi 0, %s89
      %s92 = sphi 0, %s91
      %s106 = sphi 0, %s92
      %s110 = sphi 0, %s110
      %s112 = sphi 0, %s110
      %s113 = sphi 0, %s112
      %s127 = sphi 0, %s113
      %s133 = sphi 0, %s135
      %s136 = sphi 0, %s133
      %s137 = sphi 0, %s136
      %s153 = sphi 0, %s137
    $region4: #{dvpp3d_forward.1} parent=1 // loop_header_branch
      %18 = sbr.rel (%p16) target = $region8
    $region5: #{dvpp3d_forward.1} parent=1 // loop_body
      %s20 = ssub.s32 %s15, 1
      %s21 = ssub.s32 %s15, 2
      %s28 = sadd.s32 1, %s23
      %p29 = scmp.ge.s32.totalorder %s28, 2
      %s30 = scalar_select %p29, 0, %s28
      %s31 = sadd.s32 1, %s22
      %s32 = scalar_select %p29, %s31, %s22
      %p33 = scmp.ge.s32.totalorder %s32, 1
      %s34 = scalar_select %p33, 0, %s32
      %s35 = ssub.s32 %s22, %s34
      %s36 = ssub.s32 %s23, %s30
      %s37 = sor.u32 %s35, %s36
      %p38 = scmp.eq.s32.totalorder %s37, 0
      %s40 = sadd.s32 %s39, 1
      %s41 = scalar_select %p38, %s39, %s40
      %p44 = pneg %p38
      %p45 = scmp.eq.s32.totalorder %s15, 1
      %p46 = por %p44, %p45
      %p47 = scmp.ne.s32.totalorder %s39, %s42
      %p48 = scmp.eq.s32.totalorder %s15, 0
      %p49 = por %p47, %p48
      %p50 = scmp.ne.s32.totalorder %s39, %s42
      %p51 = scmp.eq.s32.totalorder %s20, 1
      %p52 = por %p50, %p51
      %p53 = scmp.ne.s32.totalorder %s42, %s43
      %p54 = scmp.eq.s32.totalorder %s20, 0
      %p55 = por %p53, %p54
      %p56 = scmp.ne.s32.totalorder %s42, %s43
      %p57 = scmp.eq.s32.totalorder %s21, 1
      %p58 = por %p56, %p57
      %p60 = scmp.ne.s32.totalorder %s43, %s59
      %p61 = scmp.eq.s32.totalorder %s21, 0
      %p62 = por %p60, %p61
      %s63 = ssub.s32 %s23, %s30
      %p64 = scmp.eq.s32.totalorder %s63, 0
      %s66 = sadd.s32 %s65, 1
      %s67 = scalar_select %p64, %s65, %s66
      %p70 = pneg %p64
      %p71 = scmp.eq.s32.totalorder %s15, 1
      %p72 = por %p70, %p71
      %p73 = scmp.ne.s32.totalorder %s65, %s68
      %p74 = scmp.eq.s32.totalorder %s15, 0
      %p75 = por %p73, %p74
      %p76 = scmp.ne.s32.totalorder %s65, %s68
      %p77 = scmp.eq.s32.totalorder %s20, 1
      %p78 = por %p76, %p77
      %p79 = scmp.ne.s32.totalorder %s68, %s69
      %p80 = scmp.eq.s32.totalorder %s20, 0
      %p81 = por %p79, %p80
      %p82 = scmp.ne.s32.totalorder %s68, %s69
      %p83 = scmp.eq.s32.totalorder %s21, 1
      %p84 = por %p82, %p83
      %p86 = scmp.ne.s32.totalorder %s69, %s85
      %p87 = scmp.eq.s32.totalorder %s21, 0
      %p88 = por %p86, %p87
      %s90 = sadd.s32 %s89, 1
      %p93 = scmp.eq.s32.totalorder %s15, 1
      %p94 = scmp.ne.s32.totalorder %s89, %s91
      %p95 = scmp.eq.s32.totalorder %s15, 0
      %p96 = por %p94, %p95
      %p97 = scmp.ne.s32.totalorder %s89, %s91
      %p98 = scmp.eq.s32.totalorder %s20, 1
      %p99 = por %p97, %p98
      %p100 = scmp.ne.s32.totalorder %s91, %s92
      %p101 = scmp.eq.s32.totalorder %s20, 0
      %p102 = por %p100, %p101
      %p103 = scmp.ne.s32.totalorder %s91, %s92
      %p104 = scmp.eq.s32.totalorder %s21, 1
      %p105 = por %p103, %p104
      %p107 = scmp.ne.s32.totalorder %s92, %s106
      %p108 = scmp.eq.s32.totalorder %s21, 0
      %p109 = por %p107, %p108
      %s111 = sadd.s32 %s110, 1
      %p114 = scmp.eq.s32.totalorder %s15, 1
      %p115 = scmp.ne.s32.totalorder %s110, %s112
      %p116 = scmp.eq.s32.totalorder %s15, 0
      %p117 = por %p115, %p116
      %p118 = scmp.ne.s32.totalorder %s110, %s112
      %p119 = scmp.eq.s32.totalorder %s20, 1
      %p120 = por %p118, %p119
      %p121 = scmp.ne.s32.totalorder %s112, %s113
      %p122 = scmp.eq.s32.totalorder %s20, 0
      %p123 = por %p121, %p122
      %p124 = scmp.ne.s32.totalorder %s112, %s113
      %p125 = scmp.eq.s32.totalorder %s21, 1
      %p126 = por %p124, %p125
      %p128 = scmp.ne.s32.totalorder %s113, %s127
      %p129 = scmp.eq.s32.totalorder %s21, 0
      %p130 = por %p128, %p129
      %s131 = ssub.s32 %s22, %s34
      %p132 = scmp.eq.s32.totalorder %s131, 0
      %s134 = sadd.s32 %s133, 1
      %s135 = scalar_select %p132, %s133, %s134
      %p138 = pneg %p132
      %p139 = scmp.eq.s32.totalorder %s15, 1
      %p140 = por %p138, %p139
      %p141 = scmp.ne.s32.totalorder %s133, %s136
      %p142 = scmp.eq.s32.totalorder %s15, 0
      %p143 = por %p141, %p142
      %p144 = scmp.ne.s32.totalorder %s133, %s136
      %p145 = scmp.eq.s32.totalorder %s20, 1
      %p146 = por %p144, %p145
      %p147 = scmp.ne.s32.totalorder %s136, %s137
      %p148 = scmp.eq.s32.totalorder %s20, 0
      %p149 = por %p147, %p148
      %p150 = scmp.ne.s32.totalorder %s136, %s137
      %p151 = scmp.eq.s32.totalorder %s21, 1
      %p152 = por %p150, %p151
      %p154 = scmp.ne.s32.totalorder %s137, %s153
      %p155 = scmp.eq.s32.totalorder %s21, 0
      %p156 = por %p154, %p155
      %p157 = scmp.le.s32.totalorder 1, %s15
      %p158 = scmp.lt.s32.totalorder %s15, 3
      %p159 = pnand %p157, %p158
      %p160 = pneg %p159
      // Predicated region
      $region9: #{dvpp3d_forward.1} parent=5 // pred_check
        _
      $region10: #{dvpp3d_forward.1} parent=5 // pred_check_branch
        %162 = sbr.rel (%p159) target = $region12
      $region11: #{dvpp3d_forward.1} parent=5 // pred_region
        %s163 = ssub.s32 %s15, 1
        // Predicated region
        $region13: #{dvpp3d_forward.1} parent=11 // pred_check
          %p164 = pneg %p102
        $region14: #{dvpp3d_forward.1} parent=11 // pred_check_branch
          %166 = sbr.rel (%p164) target = $region16
        $region15: #{dvpp3d_forward.1} parent=11 // pred_region
          %168 = vsyncadd [#allocation7], 0
          %s169 = sshll.u32 %s2, 4
          %s170 = int_to_ptr.hbm [resolvable:$true] %s169
          %s171 = sshll.u32 [#allocation6], 4
          %s172 = int_to_ptr.vmem [resolvable:$true] %s171
          %177 = dma.hbm_to_vmem [thread:$0]  %s170, 8192, %s172, [#allocation7], 128, 128, 8
        $region16: #{dvpp3d_forward.1} parent=11 // pred_fallthru
          _
        // Predicated region
        $region17: #{dvpp3d_forward.1} parent=11 // pred_check
          %p178 = pneg %p123
        $region18: #{dvpp3d_forward.1} parent=11 // pred_check_branch
          %180 = sbr.rel (%p178) target = $region20
        $region19: #{dvpp3d_forward.1} parent=11 // pred_region
          %182 = vsyncadd [#allocation7], 0
          %s184 = sshll.u32 %s3, 4
          %s185 = int_to_ptr.hbm [resolvable:$true] %s184
          %s186 = sshll.u32 [#allocation8], 4
          %s187 = int_to_ptr.vmem [resolvable:$true] %s186
          %189 = dma.hbm_to_vmem [thread:$0]  %s185, 16, %s187, [#allocation7]
        $region20: #{dvpp3d_forward.1} parent=11 // pred_fallthru
          _
      $region12: #{dvpp3d_forward.1} parent=5 // pred_fallthru
        _
      %p190 = scmp.lt.s32.totalorder %s15, 2
      // Predicated region
      $region21: #{dvpp3d_forward.1} parent=5 // pred_check
        %p191 = pneg %p190
      $region22: #{dvpp3d_forward.1} parent=5 // pred_check_branch
        %193 = sbr.rel (%p191) target = $region24
      $region23: #{dvpp3d_forward.1} parent=5 // pred_region
        // Predicated region
        $region25: #{dvpp3d_forward.1} parent=23 // pred_check
          %p194 = pneg %p49
        $region26: #{dvpp3d_forward.1} parent=23 // pred_check_branch
          %196 = sbr.rel (%p194) target = $region28
        $region27: #{dvpp3d_forward.1} parent=23 // pred_region
          %s197 = smul.u32 16, %s23
          %p198 = scmp.lt.s32.totalorder %s22, 0
          %s199 = scalar_select %p198, %s22, 0
          %p200 = scmp.lt.s32.totalorder %s197, 31
          %s201 = scalar_select %p200, %s197, 31
          %s202 = smul.addr %s199, 32
          %s203 = sadd.s32 %s201, %s202
          %s204 = smul.addr %s203, 8
          %s205 = scalar_lea.vmem %s0, %s204
          %s206 = smul.u32 16, %s23
        $region28: #{dvpp3d_forward.1} parent=23 // pred_fallthru
          _
        // Predicated region
        $region29: #{dvpp3d_forward.1} parent=23 // pred_check
          %p207 = pneg %p75
        $region30: #{dvpp3d_forward.1} parent=23 // pred_check_branch
          %209 = sbr.rel (%p207) target = $region32
        $region31: #{dvpp3d_forward.1} parent=23 // pred_region
          %s210 = sand.u32 %s65, 1
          %s211 = scalar_lea.sflag [#allocation4], %s210
          %s212 = sand.u32 %s65, 1
          %s213 = smul.addr %s212, 2048
          %s214 = scalar_lea.vmem [#allocation3], %s213
          %s215 = smul.u32 256, %s23
          %217 = vsyncadd %s211, 0
          %s218 = smul.addr %s215, 8
          %s219 = scalar_lea.hbm %s1, %s218
          %s220 = sshll.u32 %s219, 4
          %s221 = int_to_ptr.hbm [resolvable:$true] %s220
          %s222 = sshll.u32 %s214, 4
          %s223 = int_to_ptr.vmem [resolvable:$true] %s222
          %228 = dma.hbm_to_vmem [thread:$0]  %s221, 32768, %s223, %s211, 128, 128, 8
        $region32: #{dvpp3d_forward.1} parent=23 // pred_fallthru
          _
      $region24: #{dvpp3d_forward.1} parent=5 // pred_fallthru
        _
      %p229 = scmp.le.s32.totalorder 1, %s15
      %p230 = scmp.lt.s32.totalorder %s15, 3
      %p231 = pnand %p229, %p230
      %p232 = pneg %p231
      // Predicated region
      $region33: #{dvpp3d_forward.1} parent=5 // pred_check
        _
      $region34: #{dvpp3d_forward.1} parent=5 // pred_check_branch
        %234 = sbr.rel (%p231) target = $region36
      $region35: #{dvpp3d_forward.1} parent=5 // pred_region
        %s235 = ssub.s32 %s15, 1
        %s236 = sand.u32 %s68, 1
        %s237 = scalar_lea.sflag [#allocation4], %s236
        %s238 = sand.u32 %s68, 1
        %s239 = smul.addr %s238, 2048
        %s240 = scalar_lea.vmem [#allocation3], %s239
        // Predicated region
        $region37: #{dvpp3d_forward.1} parent=35 // pred_check
          %p241 = pneg %p81
        $region38: #{dvpp3d_forward.1} parent=35 // pred_check_branch
          %243 = sbr.rel (%p241) target = $region40
        $region39: #{dvpp3d_forward.1} parent=35 // pred_region
          %245 = dma.done %s237, 32768
        $region40: #{dvpp3d_forward.1} parent=35 // pred_fallthru
          _
        // Predicated region
        $region41: #{dvpp3d_forward.1} parent=35 // pred_check
          %p246 = pneg %p102
        $region42: #{dvpp3d_forward.1} parent=35 // pred_check_branch
          %248 = sbr.rel (%p246) target = $region44
        $region43: #{dvpp3d_forward.1} parent=35 // pred_region
          %250 = dma.done [#allocation7], 8192
        $region44: #{dvpp3d_forward.1} parent=35 // pred_fallthru
          _
        // Predicated region
        $region45: #{dvpp3d_forward.1} parent=35 // pred_check
          %p251 = pneg %p123
        $region46: #{dvpp3d_forward.1} parent=35 // pred_check_branch
          %253 = sbr.rel (%p251) target = $region48
        $region47: #{dvpp3d_forward.1} parent=35 // pred_region
          %255 = dma.done [#allocation7], 16
        $region48: #{dvpp3d_forward.1} parent=35 // pred_fallthru
          _
        %s256 = smul.u32 16, %s25
        %p257 = scmp.lt.s32.totalorder %s24, 0
        %s258 = scalar_select %p257, %s24, 0
        %p259 = scmp.lt.s32.totalorder %s256, 31
        %s260 = scalar_select %p259, %s256, 31
        %s261 = smul.addr %s258, 32
        %s262 = sadd.s32 %s260, %s261
        %s263 = smul.addr %s262, 8
        %s264 = scalar_lea.vmem %s0, %s263
        %p265 = pneg %p55
        %p266 = pneg %p52
        %s267 = sand.u32 %s68, 1
        %s268 = scalar_lea.sflag [#allocation4], %s267
        %s269 = sand.u32 %s68, 1
        %s270 = smul.addr %s269, 2048
        %s271 = scalar_lea.vmem [#allocation3], %s270
        %p272 = pneg %p81
        %p273 = pneg %p78
        %p274 = pneg %p102
        %p275 = pneg %p99
        %p276 = pneg %p123
        %p277 = pneg %p120
        %p278 = pneg %p149
        %p279 = pneg %p146
        %s280 = smul.u32 16, %s25
        %p281 = scmp.lt.s32.totalorder %s24, 0
        %s282 = scalar_select %p281, %s24, 0
        %p283 = scmp.lt.s32.totalorder %s280, 31
        %s284 = scalar_select %p283, %s280, 31
        %s285 = smul.addr %s282, 32
        %s286 = sadd.s32 %s284, %s285
        %s287 = smul.addr %s286, 8
        %s288 = scalar_lea.vmem %s0, %s287
        %s289 = smul.u32 16, %s25
        %s290 = smul.u32 256, %s25
        %p291 = scmp.eq.s32.totalorder %s25, 0
        // Predicated region
        $region49: #{dvpp3d_forward.1} parent=35 // pred_check
          %p292 = pneg %p291
        $region50: #{dvpp3d_forward.1} parent=35 // pred_check_branch
          %294 = sbr.rel (%p292) target = $region52
        $region51: #{dvpp3d_forward.1} parent=35 // pred_region
          %295 = vst [vmem:[#allocation2] sm:$0xff] 0.0
        $region52: #{dvpp3d_forward.1} parent=35 // pred_fallthru
          _
        %v296 = vld [vmem:[#allocation2] sm:$0xff]
        %v297 = vld [vmem:[%s288] sm:$0xff]
        %v298 = vld [vmem:[%s288 + $0x8] sm:$0xff]
        %v299 = vld [vmem:[%s288 + $0x10] sm:$0xff]
        %v300 = vld [vmem:[%s288 + $0x18] sm:$0xff]
        %v301 = vld [vmem:[%s288 + $0x20] sm:$0xff]
        %v302 = vld [vmem:[%s288 + $0x28] sm:$0xff]
        %v303 = vld [vmem:[%s288 + $0x30] sm:$0xff]
        %v304 = vld [vmem:[%s288 + $0x38] sm:$0xff]
        %v305 = vld [vmem:[%s288 + $0x40] sm:$0xff]
        %v306 = vld [vmem:[%s288 + $0x48] sm:$0xff]
        %v307 = vld [vmem:[%s288 + $0x50] sm:$0xff]
        %v308 = vld [vmem:[%s288 + $0x58] sm:$0xff]
        %v309 = vld [vmem:[%s288 + $0x60] sm:$0xff]
        %v310 = vld [vmem:[%s288 + $0x68] sm:$0xff]
        %v311 = vld [vmem:[%s288 + $0x70] sm:$0xff]
        %v312 = vld [vmem:[%s288 + $0x78] sm:$0xff]
        %v313 = vld [vmem:[%s240] sm:$0xff]
        %v314 = vld [vmem:[%s240 + $0x8] sm:$0xff]
        %v315 = vld [vmem:[%s240 + $0x10] sm:$0xff]
        %v316 = vld [vmem:[%s240 + $0x18] sm:$0xff]
        %v317 = vld [vmem:[%s240 + $0x20] sm:$0xff]
        %v318 = vld [vmem:[%s240 + $0x28] sm:$0xff]
        %v319 = vld [vmem:[%s240 + $0x30] sm:$0xff]
        %v320 = vld [vmem:[%s240 + $0x38] sm:$0xff]
        %v321 = vld [vmem:[%s240 + $0x40] sm:$0xff]
        %v322 = vld [vmem:[%s240 + $0x48] sm:$0xff]
        %v323 = vld [vmem:[%s240 + $0x50] sm:$0xff]
        %v324 = vld [vmem:[%s240 + $0x58] sm:$0xff]
        %v325 = vld [vmem:[%s240 + $0x60] sm:$0xff]
        %v326 = vld [vmem:[%s240 + $0x68] sm:$0xff]
        %v327 = vld [vmem:[%s240 + $0x70] sm:$0xff]
        %v328 = vld [vmem:[%s240 + $0x78] sm:$0xff]
        %v329 = vld [vmem:[%s240 + $0x80] sm:$0xff]
        %v330 = vld [vmem:[%s240 + $0x88] sm:$0xff]
        %v331 = vld [vmem:[%s240 + $0x90] sm:$0xff]
        %v332 = vld [vmem:[%s240 + $0x98] sm:$0xff]
        %v333 = vld [vmem:[%s240 + $0xa0] sm:$0xff]
        %v334 = vld [vmem:[%s240 + $0xa8] sm:$0xff]
        %v335 = vld [vmem:[%s240 + $0xb0] sm:$0xff]
        %v336 = vld [vmem:[%s240 + $0xb8] sm:$0xff]
        %v337 = vld [vmem:[%s240 + $0xc0] sm:$0xff]
        %v338 = vld [vmem:[%s240 + $0xc8] sm:$0xff]
        %v339 = vld [vmem:[%s240 + $0xd0] sm:$0xff]
        %v340 = vld [vmem:[%s240 + $0xd8] sm:$0xff]
        %v341 = vld [vmem:[%s240 + $0xe0] sm:$0xff]
        %v342 = vld [vmem:[%s240 + $0xe8] sm:$0xff]
        %v343 = vld [vmem:[%s240 + $0xf0] sm:$0xff]
        %v344 = vld [vmem:[%s240 + $0xf8] sm:$0xff]
        %v345 = vld [vmem:[%s240 + $0x100] sm:$0xff]
        %v346 = vld [vmem:[%s240 + $0x108] sm:$0xff]
        %v347 = vld [vmem:[%s240 + $0x110] sm:$0xff]
        %v348 = vld [vmem:[%s240 + $0x118] sm:$0xff]
        %v349 = vld [vmem:[%s240 + $0x120] sm:$0xff]
        %v350 = vld [vmem:[%s240 + $0x128] sm:$0xff]
        %v351 = vld [vmem:[%s240 + $0x130] sm:$0xff]
        %v352 = vld [vmem:[%s240 + $0x138] sm:$0xff]
        %v353 = vld [vmem:[%s240 + $0x140] sm:$0xff]
        %v354 = vld [vmem:[%s240 + $0x148] sm:$0xff]
        %v355 = vld [vmem:[%s240 + $0x150] sm:$0xff]
        %v356 = vld [vmem:[%s240 + $0x158] sm:$0xff]
        %v357 = vld [vmem:[%s240 + $0x160] sm:$0xff]
        %v358 = vld [vmem:[%s240 + $0x168] sm:$0xff]
        %v359 = vld [vmem:[%s240 + $0x170] sm:$0xff]
        %v360 = vld [vmem:[%s240 + $0x178] sm:$0xff]
        %v361 = vld [vmem:[%s240 + $0x180] sm:$0xff]
        %v362 = vld [vmem:[%s240 + $0x188] sm:$0xff]
        %v363 = vld [vmem:[%s240 + $0x190] sm:$0xff]
        %v364 = vld [vmem:[%s240 + $0x198] sm:$0xff]
        %v365 = vld [vmem:[%s240 + $0x1a0] sm:$0xff]
        %v366 = vld [vmem:[%s240 + $0x1a8] sm:$0xff]
        %v367 = vld [vmem:[%s240 + $0x1b0] sm:$0xff]
        %v368 = vld [vmem:[%s240 + $0x1b8] sm:$0xff]
        %v369 = vld [vmem:[%s240 + $0x1c0] sm:$0xff]
        %v370 = vld [vmem:[%s240 + $0x1c8] sm:$0xff]
        %v371 = vld [vmem:[%s240 + $0x1d0] sm:$0xff]
        %v372 = vld [vmem:[%s240 + $0x1d8] sm:$0xff]
        %v373 = vld [vmem:[%s240 + $0x1e0] sm:$0xff]
        %v374 = vld [vmem:[%s240 + $0x1e8] sm:$0xff]
        %v375 = vld [vmem:[%s240 + $0x1f0] sm:$0xff]
        %v376 = vld [vmem:[%s240 + $0x1f8] sm:$0xff]
        %v377 = vld [vmem:[%s240 + $0x200] sm:$0xff]
        %v378 = vld [vmem:[%s240 + $0x208] sm:$0xff]
        %v379 = vld [vmem:[%s240 + $0x210] sm:$0xff]
        %v380 = vld [vmem:[%s240 + $0x218] sm:$0xff]
        %v381 = vld [vmem:[%s240 + $0x220] sm:$0xff]
        %v382 = vld [vmem:[%s240 + $0x228] sm:$0xff]
        %v383 = vld [vmem:[%s240 + $0x230] sm:$0xff]
        %v384 = vld [vmem:[%s240 + $0x238] sm:$0xff]
        %v385 = vld [vmem:[%s240 + $0x240] sm:$0xff]
        %v386 = vld [vmem:[%s240 + $0x248] sm:$0xff]
        %v387 = vld [vmem:[%s240 + $0x250] sm:$0xff]
        %v388 = vld [vmem:[%s240 + $0x258] sm:$0xff]
        %v389 = vld [vmem:[%s240 + $0x260] sm:$0xff]
        %v390 = vld [vmem:[%s240 + $0x268] sm:$0xff]
        %v391 = vld [vmem:[%s240 + $0x270] sm:$0xff]
        %v392 = vld [vmem:[%s240 + $0x278] sm:$0xff]
        %v393 = vld [vmem:[%s240 + $0x280] sm:$0xff]
        %v394 = vld [vmem:[%s240 + $0x288] sm:$0xff]
        %v395 = vld [vmem:[%s240 + $0x290] sm:$0xff]
        %v396 = vld [vmem:[%s240 + $0x298] sm:$0xff]
        %v397 = vld [vmem:[%s240 + $0x2a0] sm:$0xff]
        %v398 = vld [vmem:[%s240 + $0x2a8] sm:$0xff]
        %v399 = vld [vmem:[%s240 + $0x2b0] sm:$0xff]
        %v400 = vld [vmem:[%s240 + $0x2b8] sm:$0xff]
        %v401 = vld [vmem:[%s240 + $0x2c0] sm:$0xff]
        %v402 = vld [vmem:[%s240 + $0x2c8] sm:$0xff]
        %v403 = vld [vmem:[%s240 + $0x2d0] sm:$0xff]
        %v404 = vld [vmem:[%s240 + $0x2d8] sm:$0xff]
        %v405 = vld [vmem:[%s240 + $0x2e0] sm:$0xff]
        %v406 = vld [vmem:[%s240 + $0x2e8] sm:$0xff]
        %v407 = vld [vmem:[%s240 + $0x2f0] sm:$0xff]
        %v408 = vld [vmem:[%s240 + $0x2f8] sm:$0xff]
        %v409 = vld [vmem:[%s240 + $0x300] sm:$0xff]
        %v410 = vld [vmem:[%s240 + $0x308] sm:$0xff]
        %v411 = vld [vmem:[%s240 + $0x310] sm:$0xff]
        %v412 = vld [vmem:[%s240 + $0x318] sm:$0xff]
        %v413 = vld [vmem:[%s240 + $0x320] sm:$0xff]
        %v414 = vld [vmem:[%s240 + $0x328] sm:$0xff]
        %v415 = vld [vmem:[%s240 + $0x330] sm:$0xff]
        %v416 = vld [vmem:[%s240 + $0x338] sm:$0xff]
        %v417 = vld [vmem:[%s240 + $0x340] sm:$0xff]
        %v418 = vld [vmem:[%s240 + $0x348] sm:$0xff]
        %v419 = vld [vmem:[%s240 + $0x350] sm:$0xff]
        %v420 = vld [vmem:[%s240 + $0x358] sm:$0xff]
        %v421 = vld [vmem:[%s240 + $0x360] sm:$0xff]
        %v422 = vld [vmem:[%s240 + $0x368] sm:$0xff]
        %v423 = vld [vmem:[%s240 + $0x370] sm:$0xff]
        %v424 = vld [vmem:[%s240 + $0x378] sm:$0xff]
        %v425 = vld [vmem:[%s240 + $0x380] sm:$0xff]
        %v426 = vld [vmem:[%s240 + $0x388] sm:$0xff]
        %v427 = vld [vmem:[%s240 + $0x390] sm:$0xff]
        %v428 = vld [vmem:[%s240 + $0x398] sm:$0xff]
        %v429 = vld [vmem:[%s240 + $0x3a0] sm:$0xff]
        %v430 = vld [vmem:[%s240 + $0x3a8] sm:$0xff]
        %v431 = vld [vmem:[%s240 + $0x3b0] sm:$0xff]
        %v432 = vld [vmem:[%s240 + $0x3b8] sm:$0xff]
        %v433 = vld [vmem:[%s240 + $0x3c0] sm:$0xff]
        %v434 = vld [vmem:[%s240 + $0x3c8] sm:$0xff]
        %v435 = vld [vmem:[%s240 + $0x3d0] sm:$0xff]
        %v436 = vld [vmem:[%s240 + $0x3d8] sm:$0xff]
        %v437 = vld [vmem:[%s240 + $0x3e0] sm:$0xff]
        %v438 = vld [vmem:[%s240 + $0x3e8] sm:$0xff]
        %v439 = vld [vmem:[%s240 + $0x3f0] sm:$0xff]
        %v440 = vld [vmem:[%s240 + $0x3f8] sm:$0xff]
        %v441 = vld [vmem:[%s240 + $0x400] sm:$0xff]
        %v442 = vld [vmem:[%s240 + $0x408] sm:$0xff]
        %v443 = vld [vmem:[%s240 + $0x410] sm:$0xff]
        %v444 = vld [vmem:[%s240 + $0x418] sm:$0xff]
        %v445 = vld [vmem:[%s240 + $0x420] sm:$0xff]
        %v446 = vld [vmem:[%s240 + $0x428] sm:$0xff]
        %v447 = vld [vmem:[%s240 + $0x430] sm:$0xff]
        %v448 = vld [vmem:[%s240 + $0x438] sm:$0xff]
        %v449 = vld [vmem:[%s240 + $0x440] sm:$0xff]
        %v450 = vld [vmem:[%s240 + $0x448] sm:$0xff]
        %v451 = vld [vmem:[%s240 + $0x450] sm:$0xff]
        %v452 = vld [vmem:[%s240 + $0x458] sm:$0xff]
        %v453 = vld [vmem:[%s240 + $0x460] sm:$0xff]
        %v454 = vld [vmem:[%s240 + $0x468] sm:$0xff]
        %v455 = vld [vmem:[%s240 + $0x470] sm:$0xff]
        %v456 = vld [vmem:[%s240 + $0x478] sm:$0xff]
        %v457 = vld [vmem:[%s240 + $0x480] sm:$0xff]
        %v458 = vld [vmem:[%s240 + $0x488] sm:$0xff]
        %v459 = vld [vmem:[%s240 + $0x490] sm:$0xff]
        %v460 = vld [vmem:[%s240 + $0x498] sm:$0xff]
        %v461 = vld [vmem:[%s240 + $0x4a0] sm:$0xff]
        %v462 = vld [vmem:[%s240 + $0x4a8] sm:$0xff]
        %v463 = vld [vmem:[%s240 + $0x4b0] sm:$0xff]
        %v464 = vld [vmem:[%s240 + $0x4b8] sm:$0xff]
        %v465 = vld [vmem:[%s240 + $0x4c0] sm:$0xff]
        %v466 = vld [vmem:[%s240 + $0x4c8] sm:$0xff]
        %v467 = vld [vmem:[%s240 + $0x4d0] sm:$0xff]
        %v468 = vld [vmem:[%s240 + $0x4d8] sm:$0xff]
        %v469 = vld [vmem:[%s240 + $0x4e0] sm:$0xff]
        %v470 = vld [vmem:[%s240 + $0x4e8] sm:$0xff]
        %v471 = vld [vmem:[%s240 + $0x4f0] sm:$0xff]
        %v472 = vld [vmem:[%s240 + $0x4f8] sm:$0xff]
        %v473 = vld [vmem:[%s240 + $0x500] sm:$0xff]
        %v474 = vld [vmem:[%s240 + $0x508] sm:$0xff]
        %v475 = vld [vmem:[%s240 + $0x510] sm:$0xff]
        %v476 = vld [vmem:[%s240 + $0x518] sm:$0xff]
        %v477 = vld [vmem:[%s240 + $0x520] sm:$0xff]
        %v478 = vld [vmem:[%s240 + $0x528] sm:$0xff]
        %v479 = vld [vmem:[%s240 + $0x530] sm:$0xff]
        %v480 = vld [vmem:[%s240 + $0x538] sm:$0xff]
        %v481 = vld [vmem:[%s240 + $0x540] sm:$0xff]
        %v482 = vld [vmem:[%s240 + $0x548] sm:$0xff]
        %v483 = vld [vmem:[%s240 + $0x550] sm:$0xff]
        %v484 = vld [vmem:[%s240 + $0x558] sm:$0xff]
        %v485 = vld [vmem:[%s240 + $0x560] sm:$0xff]
        %v486 = vld [vmem:[%s240 + $0x568] sm:$0xff]
        %v487 = vld [vmem:[%s240 + $0x570] sm:$0xff]
        %v488 = vld [vmem:[%s240 + $0x578] sm:$0xff]
        %v489 = vld [vmem:[%s240 + $0x580] sm:$0xff]
        %v490 = vld [vmem:[%s240 + $0x588] sm:$0xff]
        %v491 = vld [vmem:[%s240 + $0x590] sm:$0xff]
        %v492 = vld [vmem:[%s240 + $0x598] sm:$0xff]
        %v493 = vld [vmem:[%s240 + $0x5a0] sm:$0xff]
        %v494 = vld [vmem:[%s240 + $0x5a8] sm:$0xff]
        %v495 = vld [vmem:[%s240 + $0x5b0] sm:$0xff]
        %v496 = vld [vmem:[%s240 + $0x5b8] sm:$0xff]
        %v497 = vld [vmem:[%s240 + $0x5c0] sm:$0xff]
        %v498 = vld [vmem:[%s240 + $0x5c8] sm:$0xff]
        %v499 = vld [vmem:[%s240 + $0x5d0] sm:$0xff]
        %v500 = vld [vmem:[%s240 + $0x5d8] sm:$0xff]
        %v501 = vld [vmem:[%s240 + $0x5e0] sm:$0xff]
        %v502 = vld [vmem:[%s240 + $0x5e8] sm:$0xff]
        %v503 = vld [vmem:[%s240 + $0x5f0] sm:$0xff]
        %v504 = vld [vmem:[%s240 + $0x5f8] sm:$0xff]
        %v505 = vld [vmem:[%s240 + $0x600] sm:$0xff]
        %v506 = vld [vmem:[%s240 + $0x608] sm:$0xff]
        %v507 = vld [vmem:[%s240 + $0x610] sm:$0xff]
        %v508 = vld [vmem:[%s240 + $0x618] sm:$0xff]
        %v509 = vld [vmem:[%s240 + $0x620] sm:$0xff]
        %v510 = vld [vmem:[%s240 + $0x628] sm:$0xff]
        %v511 = vld [vmem:[%s240 + $0x630] sm:$0xff]
        %v512 = vld [vmem:[%s240 + $0x638] sm:$0xff]
        %v513 = vld [vmem:[%s240 + $0x640] sm:$0xff]
        %v514 = vld [vmem:[%s240 + $0x648] sm:$0xff]
        %v515 = vld [vmem:[%s240 + $0x650] sm:$0xff]
        %v516 = vld [vmem:[%s240 + $0x658] sm:$0xff]
        %v517 = vld [vmem:[%s240 + $0x660] sm:$0xff]
        %v518 = vld [vmem:[%s240 + $0x668] sm:$0xff]
        %v519 = vld [vmem:[%s240 + $0x670] sm:$0xff]
        %v520 = vld [vmem:[%s240 + $0x678] sm:$0xff]
        %v521 = vld [vmem:[%s240 + $0x680] sm:$0xff]
        %v522 = vld [vmem:[%s240 + $0x688] sm:$0xff]
        %v523 = vld [vmem:[%s240 + $0x690] sm:$0xff]
        %v524 = vld [vmem:[%s240 + $0x698] sm:$0xff]
        %v525 = vld [vmem:[%s240 + $0x6a0] sm:$0xff]
        %v526 = vld [vmem:[%s240 + $0x6a8] sm:$0xff]
        %v527 = vld [vmem:[%s240 + $0x6b0] sm:$0xff]
        %v528 = vld [vmem:[%s240 + $0x6b8] sm:$0xff]
        %v529 = vld [vmem:[%s240 + $0x6c0] sm:$0xff]
        %v530 = vld [vmem:[%s240 + $0x6c8] sm:$0xff]
        %v531 = vld [vmem:[%s240 + $0x6d0] sm:$0xff]
        %v532 = vld [vmem:[%s240 + $0x6d8] sm:$0xff]
        %v533 = vld [vmem:[%s240 + $0x6e0] sm:$0xff]
        %v534 = vld [vmem:[%s240 + $0x6e8] sm:$0xff]
        %v535 = vld [vmem:[%s240 + $0x6f0] sm:$0xff]
        %v536 = vld [vmem:[%s240 + $0x6f8] sm:$0xff]
        %v537 = vld [vmem:[%s240 + $0x700] sm:$0xff]
        %v538 = vld [vmem:[%s240 + $0x708] sm:$0xff]
        %v539 = vld [vmem:[%s240 + $0x710] sm:$0xff]
        %v540 = vld [vmem:[%s240 + $0x718] sm:$0xff]
        %v541 = vld [vmem:[%s240 + $0x720] sm:$0xff]
        %v542 = vld [vmem:[%s240 + $0x728] sm:$0xff]
        %v543 = vld [vmem:[%s240 + $0x730] sm:$0xff]
        %v544 = vld [vmem:[%s240 + $0x738] sm:$0xff]
        %v545 = vld [vmem:[%s240 + $0x740] sm:$0xff]
        %v546 = vld [vmem:[%s240 + $0x748] sm:$0xff]
        %v547 = vld [vmem:[%s240 + $0x750] sm:$0xff]
        %v548 = vld [vmem:[%s240 + $0x758] sm:$0xff]
        %v549 = vld [vmem:[%s240 + $0x760] sm:$0xff]
        %v550 = vld [vmem:[%s240 + $0x768] sm:$0xff]
        %v551 = vld [vmem:[%s240 + $0x770] sm:$0xff]
        %v552 = vld [vmem:[%s240 + $0x778] sm:$0xff]
        %v553 = vld [vmem:[%s240 + $0x780] sm:$0xff]
        %v554 = vld [vmem:[%s240 + $0x788] sm:$0xff]
        %v555 = vld [vmem:[%s240 + $0x790] sm:$0xff]
        %v556 = vld [vmem:[%s240 + $0x798] sm:$0xff]
        %v557 = vld [vmem:[%s240 + $0x7a0] sm:$0xff]
        %v558 = vld [vmem:[%s240 + $0x7a8] sm:$0xff]
        %v559 = vld [vmem:[%s240 + $0x7b0] sm:$0xff]
        %v560 = vld [vmem:[%s240 + $0x7b8] sm:$0xff]
        %v561 = vld [vmem:[%s240 + $0x7c0] sm:$0xff]
        %v562 = vld [vmem:[%s240 + $0x7c8] sm:$0xff]
        %v563 = vld [vmem:[%s240 + $0x7d0] sm:$0xff]
        %v564 = vld [vmem:[%s240 + $0x7d8] sm:$0xff]
        %v565 = vld [vmem:[%s240 + $0x7e0] sm:$0xff]
        %v566 = vld [vmem:[%s240 + $0x7e8] sm:$0xff]
        %v567 = vld [vmem:[%s240 + $0x7f0] sm:$0xff]
        %v568 = vld [vmem:[%s240 + $0x7f8] sm:$0xff]
        %569 = vmatpush.msra.mxu0 %v328
        %570 = vmatpush.msra.mxu0 %v327
        %571 = vmatpush.msra.mxu0 %v326
        %572 = vmatpush.msra.mxu0 %v325
        %573 = vmatpush.msra.mxu0 %v324
        %574 = vmatpush.msra.mxu0 %v323
        %575 = vmatpush.msra.mxu0 %v322
        %576 = vmatpush.msra.mxu0 %v321
        %577 = vmatpush.msra.mxu0 %v320
        %578 = vmatpush.msra.mxu0 %v319
        %579 = vmatpush.msra.mxu0 %v318
        %580 = vmatpush.msra.mxu0 %v317
        %581 = vmatpush.msra.mxu0 %v316
        %582 = vmatpush.msra.mxu0 %v315
        %583 = vmatpush.msra.mxu0 %v314
        %584 = vmatpush.msra.mxu0 %v313
        %585 = vmatmul.f32.gmra.mxu0 %v297
        %v586 = vpop.f32.mrf.mxu0
        %v587 = vadd.f32 0.0, %v586
        %588 = vdwg.mxu0
        %589 = vmatpush.msra.mxu0 %v344
        %590 = vmatpush.msra.mxu0 %v343
        %591 = vmatpush.msra.mxu0 %v342
        %592 = vmatpush.msra.mxu0 %v341
        %593 = vmatpush.msra.mxu0 %v340
        %594 = vmatpush.msra.mxu0 %v339
        %595 = vmatpush.msra.mxu0 %v338
        %596 = vmatpush.msra.mxu0 %v337
        %597 = vmatpush.msra.mxu0 %v336
        %598 = vmatpush.msra.mxu0 %v335
        %599 = vmatpush.msra.mxu0 %v334
        %600 = vmatpush.msra.mxu0 %v333
        %601 = vmatpush.msra.mxu0 %v332
        %602 = vmatpush.msra.mxu0 %v331
        %603 = vmatpush.msra.mxu0 %v330
        %604 = vmatpush.msra.mxu0 %v329
        %605 = vmatmul.f32.gmra.mxu0 %v298
        %v606 = vpop.f32.mrf.mxu0
        %v607 = vadd.f32 %v587, %v606
        %608 = vdwg.mxu0
        %609 = vmatpush.msra.mxu0 %v360
        %610 = vmatpush.msra.mxu0 %v359
        %611 = vmatpush.msra.mxu0 %v358
        %612 = vmatpush.msra.mxu0 %v357
        %613 = vmatpush.msra.mxu0 %v356
        %614 = vmatpush.msra.mxu0 %v355
        %615 = vmatpush.msra.mxu0 %v354
        %616 = vmatpush.msra.mxu0 %v353
        %617 = vmatpush.msra.mxu0 %v352
        %618 = vmatpush.msra.mxu0 %v351
        %619 = vmatpush.msra.mxu0 %v350
        %620 = vmatpush.msra.mxu0 %v349
        %621 = vmatpush.msra.mxu0 %v348
        %622 = vmatpush.msra.mxu0 %v347
        %623 = vmatpush.msra.mxu0 %v346
        %624 = vmatpush.msra.mxu0 %v345
        %625 = vmatmul.f32.gmra.mxu0 %v299
        %v626 = vpop.f32.mrf.mxu0
        %v627 = vadd.f32 %v607, %v626
        %628 = vdwg.mxu0
        %629 = vmatpush.msra.mxu0 %v376
        %630 = vmatpush.msra.mxu0 %v375
        %631 = vmatpush.msra.mxu0 %v374
        %632 = vmatpush.msra.mxu0 %v373
        %633 = vmatpush.msra.mxu0 %v372
        %634 = vmatpush.msra.mxu0 %v371
        %635 = vmatpush.msra.mxu0 %v370
        %636 = vmatpush.msra.mxu0 %v369
        %637 = vmatpush.msra.mxu0 %v368
        %638 = vmatpush.msra.mxu0 %v367
        %639 = vmatpush.msra.mxu0 %v366
        %640 = vmatpush.msra.mxu0 %v365
        %641 = vmatpush.msra.mxu0 %v364
        %642 = vmatpush.msra.mxu0 %v363
        %643 = vmatpush.msra.mxu0 %v362
        %644 = vmatpush.msra.mxu0 %v361
        %645 = vmatmul.f32.gmra.mxu0 %v300
        %v646 = vpop.f32.mrf.mxu0
        %v647 = vadd.f32 %v627, %v646
        %648 = vdwg.mxu0
        %649 = vmatpush.msra.mxu0 %v392
        %650 = vmatpush.msra.mxu0 %v391
        %651 = vmatpush.msra.mxu0 %v390
        %652 = vmatpush.msra.mxu0 %v389
        %653 = vmatpush.msra.mxu0 %v388
        %654 = vmatpush.msra.mxu0 %v387
        %655 = vmatpush.msra.mxu0 %v386
        %656 = vmatpush.msra.mxu0 %v385
        %657 = vmatpush.msra.mxu0 %v384
        %658 = vmatpush.msra.mxu0 %v383
        %659 = vmatpush.msra.mxu0 %v382
        %660 = vmatpush.msra.mxu0 %v381
        %661 = vmatpush.msra.mxu0 %v380
        %662 = vmatpush.msra.mxu0 %v379
        %663 = vmatpush.msra.mxu0 %v378
        %664 = vmatpush.msra.mxu0 %v377
        %665 = vmatmul.f32.gmra.mxu0 %v301
        %v666 = vpop.f32.mrf.mxu0
        %v667 = vadd.f32 %v647, %v666
        %668 = vdwg.mxu0
        %669 = vmatpush.msra.mxu0 %v408
        %670 = vmatpush.msra.mxu0 %v407
        %671 = vmatpush.msra.mxu0 %v406
        %672 = vmatpush.msra.mxu0 %v405
        %673 = vmatpush.msra.mxu0 %v404
        %674 = vmatpush.msra.mxu0 %v403
        %675 = vmatpush.msra.mxu0 %v402
        %676 = vmatpush.msra.mxu0 %v401
        %677 = vmatpush.msra.mxu0 %v400
        %678 = vmatpush.msra.mxu0 %v399
        %679 = vmatpush.msra.mxu0 %v398
        %680 = vmatpush.msra.mxu0 %v397
        %681 = vmatpush.msra.mxu0 %v396
        %682 = vmatpush.msra.mxu0 %v395
        %683 = vmatpush.msra.mxu0 %v394
        %684 = vmatpush.msra.mxu0 %v393
        %685 = vmatmul.f32.gmra.mxu0 %v302
        %v686 = vpop.f32.mrf.mxu0
        %v687 = vadd.f32 %v667, %v686
        %688 = vdwg.mxu0
        %689 = vmatpush.msra.mxu0 %v424
        %690 = vmatpush.msra.mxu0 %v423
        %691 = vmatpush.msra.mxu0 %v422
        %692 = vmatpush.msra.mxu0 %v421
        %693 = vmatpush.msra.mxu0 %v420
        %694 = vmatpush.msra.mxu0 %v419
        %695 = vmatpush.msra.mxu0 %v418
        %696 = vmatpush.msra.mxu0 %v417
        %697 = vmatpush.msra.mxu0 %v416
        %698 = vmatpush.msra.mxu0 %v415
        %699 = vmatpush.msra.mxu0 %v414
        %700 = vmatpush.msra.mxu0 %v413
        %701 = vmatpush.msra.mxu0 %v412
        %702 = vmatpush.msra.mxu0 %v411
        %703 = vmatpush.msra.mxu0 %v410
        %704 = vmatpush.msra.mxu0 %v409
        %705 = vmatmul.f32.gmra.mxu0 %v303
        %v706 = vpop.f32.mrf.mxu0
        %v707 = vadd.f32 %v687, %v706
        %708 = vdwg.mxu0
        %709 = vmatpush.msra.mxu0 %v440
        %710 = vmatpush.msra.mxu0 %v439
        %711 = vmatpush.msra.mxu0 %v438
        %712 = vmatpush.msra.mxu0 %v437
        %713 = vmatpush.msra.mxu0 %v436
        %714 = vmatpush.msra.mxu0 %v435
        %715 = vmatpush.msra.mxu0 %v434
        %716 = vmatpush.msra.mxu0 %v433
        %717 = vmatpush.msra.mxu0 %v432
        %718 = vmatpush.msra.mxu0 %v431
        %719 = vmatpush.msra.mxu0 %v430
        %720 = vmatpush.msra.mxu0 %v429
        %721 = vmatpush.msra.mxu0 %v428
        %722 = vmatpush.msra.mxu0 %v427
        %723 = vmatpush.msra.mxu0 %v426
        %724 = vmatpush.msra.mxu0 %v425
        %725 = vmatmul.f32.gmra.mxu0 %v304
        %v726 = vpop.f32.mrf.mxu0
        %v727 = vadd.f32 %v707, %v726
        %728 = vdwg.mxu0
        %729 = vmatpush.msra.mxu0 %v456
        %730 = vmatpush.msra.mxu0 %v455
        %731 = vmatpush.msra.mxu0 %v454
        %732 = vmatpush.msra.mxu0 %v453
        %733 = vmatpush.msra.mxu0 %v452
        %734 = vmatpush.msra.mxu0 %v451
        %735 = vmatpush.msra.mxu0 %v450
        %736 = vmatpush.msra.mxu0 %v449
        %737 = vmatpush.msra.mxu0 %v448
        %738 = vmatpush.msra.mxu0 %v447
        %739 = vmatpush.msra.mxu0 %v446
        %740 = vmatpush.msra.mxu0 %v445
        %741 = vmatpush.msra.mxu0 %v444
        %742 = vmatpush.msra.mxu0 %v443
        %743 = vmatpush.msra.mxu0 %v442
        %744 = vmatpush.msra.mxu0 %v441
        %745 = vmatmul.f32.gmra.mxu0 %v305
        %v746 = vpop.f32.mrf.mxu0
        %v747 = vadd.f32 %v727, %v746
        %748 = vdwg.mxu0
        %749 = vmatpush.msra.mxu0 %v472
        %750 = vmatpush.msra.mxu0 %v471
        %751 = vmatpush.msra.mxu0 %v470
        %752 = vmatpush.msra.mxu0 %v469
        %753 = vmatpush.msra.mxu0 %v468
        %754 = vmatpush.msra.mxu0 %v467
        %755 = vmatpush.msra.mxu0 %v466
        %756 = vmatpush.msra.mxu0 %v465
        %757 = vmatpush.msra.mxu0 %v464
        %758 = vmatpush.msra.mxu0 %v463
        %759 = vmatpush.msra.mxu0 %v462
        %760 = vmatpush.msra.mxu0 %v461
        %761 = vmatpush.msra.mxu0 %v460
        %762 = vmatpush.msra.mxu0 %v459
        %763 = vmatpush.msra.mxu0 %v458
        %764 = vmatpush.msra.mxu0 %v457
        %765 = vmatmul.f32.gmra.mxu0 %v306
        %v766 = vpop.f32.mrf.mxu0
        %v767 = vadd.f32 %v747, %v766
        %768 = vdwg.mxu0
        %769 = vmatpush.msra.mxu0 %v488
        %770 = vmatpush.msra.mxu0 %v487
        %771 = vmatpush.msra.mxu0 %v486
        %772 = vmatpush.msra.mxu0 %v485
        %773 = vmatpush.msra.mxu0 %v484
        %774 = vmatpush.msra.mxu0 %v483
        %775 = vmatpush.msra.mxu0 %v482
        %776 = vmatpush.msra.mxu0 %v481
        %777 = vmatpush.msra.mxu0 %v480
        %778 = vmatpush.msra.mxu0 %v479
        %779 = vmatpush.msra.mxu0 %v478
        %780 = vmatpush.msra.mxu0 %v477
        %781 = vmatpush.msra.mxu0 %v476
        %782 = vmatpush.msra.mxu0 %v475
        %783 = vmatpush.msra.mxu0 %v474
        %784 = vmatpush.msra.mxu0 %v473
        %785 = vmatmul.f32.gmra.mxu0 %v307
        %v786 = vpop.f32.mrf.mxu0
        %v787 = vadd.f32 %v767, %v786
        %788 = vdwg.mxu0
        %789 = vmatpush.msra.mxu0 %v504
        %790 = vmatpush.msra.mxu0 %v503
        %791 = vmatpush.msra.mxu0 %v502
        %792 = vmatpush.msra.mxu0 %v501
        %793 = vmatpush.msra.mxu0 %v500
        %794 = vmatpush.msra.mxu0 %v499
        %795 = vmatpush.msra.mxu0 %v498
        %796 = vmatpush.msra.mxu0 %v497
        %797 = vmatpush.msra.mxu0 %v496
        %798 = vmatpush.msra.mxu0 %v495
        %799 = vmatpush.msra.mxu0 %v494
        %800 = vmatpush.msra.mxu0 %v493
        %801 = vmatpush.msra.mxu0 %v492
        %802 = vmatpush.msra.mxu0 %v491
        %803 = vmatpush.msra.mxu0 %v490
        %804 = vmatpush.msra.mxu0 %v489
        %805 = vmatmul.f32.gmra.mxu0 %v308
        %v806 = vpop.f32.mrf.mxu0
        %v807 = vadd.f32 %v787, %v806
        %808 = vdwg.mxu0
        %809 = vmatpush.msra.mxu0 %v520
        %810 = vmatpush.msra.mxu0 %v519
        %811 = vmatpush.msra.mxu0 %v518
        %812 = vmatpush.msra.mxu0 %v517
        %813 = vmatpush.msra.mxu0 %v516
        %814 = vmatpush.msra.mxu0 %v515
        %815 = vmatpush.msra.mxu0 %v514
        %816 = vmatpush.msra.mxu0 %v513
        %817 = vmatpush.msra.mxu0 %v512
        %818 = vmatpush.msra.mxu0 %v511
        %819 = vmatpush.msra.mxu0 %v510
        %820 = vmatpush.msra.mxu0 %v509
        %821 = vmatpush.msra.mxu0 %v508
        %822 = vmatpush.msra.mxu0 %v507
        %823 = vmatpush.msra.mxu0 %v506
        %824 = vmatpush.msra.mxu0 %v505
        %825 = vmatmul.f32.gmra.mxu0 %v309
        %v826 = vpop.f32.mrf.mxu0
        %v827 = vadd.f32 %v807, %v826
        %828 = vdwg.mxu0
        %829 = vmatpush.msra.mxu0 %v536
        %830 = vmatpush.msra.mxu0 %v535
        %831 = vmatpush.msra.mxu0 %v534
        %832 = vmatpush.msra.mxu0 %v533
        %833 = vmatpush.msra.mxu0 %v532
        %834 = vmatpush.msra.mxu0 %v531
        %835 = vmatpush.msra.mxu0 %v530
        %836 = vmatpush.msra.mxu0 %v529
        %837 = vmatpush.msra.mxu0 %v528
        %838 = vmatpush.msra.mxu0 %v527
        %839 = vmatpush.msra.mxu0 %v526
        %840 = vmatpush.msra.mxu0 %v525
        %841 = vmatpush.msra.mxu0 %v524
        %842 = vmatpush.msra.mxu0 %v523
        %843 = vmatpush.msra.mxu0 %v522
        %844 = vmatpush.msra.mxu0 %v521
        %845 = vmatmul.f32.gmra.mxu0 %v310
        %v846 = vpop.f32.mrf.mxu0
        %v847 = vadd.f32 %v827, %v846
        %848 = vdwg.mxu0
        %849 = vmatpush.msra.mxu0 %v552
        %850 = vmatpush.msra.mxu0 %v551
        %851 = vmatpush.msra.mxu0 %v550
        %852 = vmatpush.msra.mxu0 %v549
        %853 = vmatpush.msra.mxu0 %v548
        %854 = vmatpush.msra.mxu0 %v547
        %855 = vmatpush.msra.mxu0 %v546
        %856 = vmatpush.msra.mxu0 %v545
        %857 = vmatpush.msra.mxu0 %v544
        %858 = vmatpush.msra.mxu0 %v543
        %859 = vmatpush.msra.mxu0 %v542
        %860 = vmatpush.msra.mxu0 %v541
        %861 = vmatpush.msra.mxu0 %v540
        %862 = vmatpush.msra.mxu0 %v539
        %863 = vmatpush.msra.mxu0 %v538
        %864 = vmatpush.msra.mxu0 %v537
        %865 = vmatmul.f32.gmra.mxu0 %v311
        %v866 = vpop.f32.mrf.mxu0
        %v867 = vadd.f32 %v847, %v866
        %868 = vdwg.mxu0
        %869 = vmatpush.msra.mxu0 %v568
        %870 = vmatpush.msra.mxu0 %v567
        %871 = vmatpush.msra.mxu0 %v566
        %872 = vmatpush.msra.mxu0 %v565
        %873 = vmatpush.msra.mxu0 %v564
        %874 = vmatpush.msra.mxu0 %v563
        %875 = vmatpush.msra.mxu0 %v562
        %876 = vmatpush.msra.mxu0 %v561
        %877 = vmatpush.msra.mxu0 %v560
        %878 = vmatpush.msra.mxu0 %v559
        %879 = vmatpush.msra.mxu0 %v558
        %880 = vmatpush.msra.mxu0 %v557
        %881 = vmatpush.msra.mxu0 %v556
        %882 = vmatpush.msra.mxu0 %v555
        %883 = vmatpush.msra.mxu0 %v554
        %884 = vmatpush.msra.mxu0 %v553
        %885 = vmatmul.f32.gmra.mxu0 %v312
        %v886 = vpop.f32.mrf.mxu0
        %v887 = vadd.f32 %v867, %v886
        %888 = vdwg.mxu0
        %v889 = vadd.f32 %v296, %v887
        %890 = vst [vmem:[#allocation2] sm:$0xff] %v889
        %p891 = scmp.eq.s32.totalorder %s25, 1
        // Predicated region
        $region53: #{dvpp3d_forward.1} parent=35 // pred_check
          %p892 = pneg %p891
        $region54: #{dvpp3d_forward.1} parent=35 // pred_check_branch
          %894 = sbr.rel (%p892) target = $region56
        $region55: #{dvpp3d_forward.1} parent=35 // pred_region
          %v895 = vld [vmem:[#allocation2] ss:$4 sm:$0x3]
          %v896 = vld [vmem:[#allocation6] sm:$0xff]
          %v897 = vld [vmem:[#allocation6 + $0x8] sm:$0xff]
          %v898 = vld [vmem:[#allocation6 + $0x10] sm:$0xff]
          %v899 = vld [vmem:[#allocation6 + $0x18] sm:$0xff]
          %v900 = vld [vmem:[#allocation6 + $0x20] sm:$0xff]
          %v901 = vld [vmem:[#allocation6 + $0x28] sm:$0xff]
          %v902 = vld [vmem:[#allocation6 + $0x30] sm:$0xff]
          %v903 = vld [vmem:[#allocation6 + $0x38] sm:$0xff]
          %v904 = vld [vmem:[#allocation6 + $0x40] sm:$0xff]
          %v905 = vld [vmem:[#allocation6 + $0x48] sm:$0xff]
          %v906 = vld [vmem:[#allocation6 + $0x50] sm:$0xff]
          %v907 = vld [vmem:[#allocation6 + $0x58] sm:$0xff]
          %v908 = vld [vmem:[#allocation6 + $0x60] sm:$0xff]
          %v909 = vld [vmem:[#allocation6 + $0x68] sm:$0xff]
          %v910 = vld [vmem:[#allocation6 + $0x70] sm:$0xff]
          %v911 = vld [vmem:[#allocation6 + $0x78] sm:$0xff]
          %s912 = scalar_lea.vmem [#allocation2], 1
          %v913 = vld [vmem:[%s912] ss:$4 sm:$0x3]
          %s914 = scalar_lea.vmem [#allocation6], 128
          %v915 = vld [vmem:[%s914] sm:$0xff]
          %v916 = vld [vmem:[%s914 + $0x8] sm:$0xff]
          %v917 = vld [vmem:[%s914 + $0x10] sm:$0xff]
          %v918 = vld [vmem:[%s914 + $0x18] sm:$0xff]
          %v919 = vld [vmem:[%s914 + $0x20] sm:$0xff]
          %v920 = vld [vmem:[%s914 + $0x28] sm:$0xff]
          %v921 = vld [vmem:[%s914 + $0x30] sm:$0xff]
          %v922 = vld [vmem:[%s914 + $0x38] sm:$0xff]
          %v923 = vld [vmem:[%s914 + $0x40] sm:$0xff]
          %v924 = vld [vmem:[%s914 + $0x48] sm:$0xff]
          %v925 = vld [vmem:[%s914 + $0x50] sm:$0xff]
          %v926 = vld [vmem:[%s914 + $0x58] sm:$0xff]
          %v927 = vld [vmem:[%s914 + $0x60] sm:$0xff]
          %v928 = vld [vmem:[%s914 + $0x68] sm:$0xff]
          %v929 = vld [vmem:[%s914 + $0x70] sm:$0xff]
          %v930 = vld [vmem:[%s914 + $0x78] sm:$0xff]
          %931 = vmatpush.msra.mxu0 %v930
          %932 = vmatpush.msra.mxu0 %v929
          %933 = vmatpush.msra.mxu0 %v928
          %934 = vmatpush.msra.mxu0 %v927
          %935 = vmatpush.msra.mxu0 %v926
          %936 = vmatpush.msra.mxu0 %v925
          %937 = vmatpush.msra.mxu0 %v924
          %938 = vmatpush.msra.mxu0 %v923
          %939 = vmatpush.msra.mxu0 %v922
          %940 = vmatpush.msra.mxu0 %v921
          %941 = vmatpush.msra.mxu0 %v920
          %942 = vmatpush.msra.mxu0 %v919
          %943 = vmatpush.msra.mxu0 %v918
          %944 = vmatpush.msra.mxu0 %v917
          %945 = vmatpush.msra.mxu0 %v916
          %946 = vmatpush.msra.mxu0 %v915
          %947 = vmatmul.f32.gmra.mxu0 %v913
          %v948 = vpop.f32.mrf.mxu0
          %v949 = vadd.f32 0.0, %v948
          %950 = vdwg.mxu0
          %951 = vmatpush.msra.mxu0 %v911
          %952 = vmatpush.msra.mxu0 %v910
          %953 = vmatpush.msra.mxu0 %v909
          %954 = vmatpush.msra.mxu0 %v908
          %955 = vmatpush.msra.mxu0 %v907
          %956 = vmatpush.msra.mxu0 %v906
          %957 = vmatpush.msra.mxu0 %v905
          %958 = vmatpush.msra.mxu0 %v904
          %959 = vmatpush.msra.mxu0 %v903
          %960 = vmatpush.msra.mxu0 %v902
          %961 = vmatpush.msra.mxu0 %v901
          %962 = vmatpush.msra.mxu0 %v900
          %963 = vmatpush.msra.mxu0 %v899
          %964 = vmatpush.msra.mxu0 %v898
          %965 = vmatpush.msra.mxu0 %v897
          %966 = vmatpush.msra.mxu0 %v896
          %967 = vmatmul.f32.gmra.mxu0 %v895
          %v968 = vpop.f32.mrf.mxu0
          %v969 = vadd.f32 %v949, %v968
          %970 = vdwg.mxu0
          %s971 = scalar_lea.vmem [#allocation2], 2
          %v972 = vld [vmem:[%s971] ss:$4 sm:$0x3]
          %s973 = scalar_lea.vmem [#allocation6], 256
          %v974 = vld [vmem:[%s973] sm:$0xff]
          %v975 = vld [vmem:[%s973 + $0x8] sm:$0xff]
          %v976 = vld [vmem:[%s973 + $0x10] sm:$0xff]
          %v977 = vld [vmem:[%s973 + $0x18] sm:$0xff]
          %v978 = vld [vmem:[%s973 + $0x20] sm:$0xff]
          %v979 = vld [vmem:[%s973 + $0x28] sm:$0xff]
          %v980 = vld [vmem:[%s973 + $0x30] sm:$0xff]
          %v981 = vld [vmem:[%s973 + $0x38] sm:$0xff]
          %v982 = vld [vmem:[%s973 + $0x40] sm:$0xff]
          %v983 = vld [vmem:[%s973 + $0x48] sm:$0xff]
          %v984 = vld [vmem:[%s973 + $0x50] sm:$0xff]
          %v985 = vld [vmem:[%s973 + $0x58] sm:$0xff]
          %v986 = vld [vmem:[%s973 + $0x60] sm:$0xff]
          %v987 = vld [vmem:[%s973 + $0x68] sm:$0xff]
          %v988 = vld [vmem:[%s973 + $0x70] sm:$0xff]
          %v989 = vld [vmem:[%s973 + $0x78] sm:$0xff]
          %990 = vmatpush.msra.mxu0 %v989
          %991 = vmatpush.msra.mxu0 %v988
          %992 = vmatpush.msra.mxu0 %v987
          %993 = vmatpush.msra.mxu0 %v986
          %994 = vmatpush.msra.mxu0 %v985
          %995 = vmatpush.msra.mxu0 %v984
          %996 = vmatpush.msra.mxu0 %v983
          %997 = vmatpush.msra.mxu0 %v982
          %998 = vmatpush.msra.mxu0 %v981
          %999 = vmatpush.msra.mxu0 %v980
          %1000 = vmatpush.msra.mxu0 %v979
          %1001 = vmatpush.msra.mxu0 %v978
          %1002 = vmatpush.msra.mxu0 %v977
          %1003 = vmatpush.msra.mxu0 %v976
          %1004 = vmatpush.msra.mxu0 %v975
          %1005 = vmatpush.msra.mxu0 %v974
          %1006 = vmatmul.f32.gmra.mxu0 %v972
          %v1007 = vpop.f32.mrf.mxu0
          %v1008 = vadd.f32 0.0, %v1007
          %1009 = vdwg.mxu0
          %v1010 = vadd.f32 %v969, %v1008
          %s1011 = scalar_lea.vmem [#allocation2], 3
          %v1012 = vld [vmem:[%s1011] ss:$4 sm:$0x3]
          %s1013 = scalar_lea.vmem [#allocation6], 384
          %v1014 = vld [vmem:[%s1013] sm:$0xff]
          %v1015 = vld [vmem:[%s1013 + $0x8] sm:$0xff]
          %v1016 = vld [vmem:[%s1013 + $0x10] sm:$0xff]
          %v1017 = vld [vmem:[%s1013 + $0x18] sm:$0xff]
          %v1018 = vld [vmem:[%s1013 + $0x20] sm:$0xff]
          %v1019 = vld [vmem:[%s1013 + $0x28] sm:$0xff]
          %v1020 = vld [vmem:[%s1013 + $0x30] sm:$0xff]
          %v1021 = vld [vmem:[%s1013 + $0x38] sm:$0xff]
          %v1022 = vld [vmem:[%s1013 + $0x40] sm:$0xff]
          %v1023 = vld [vmem:[%s1013 + $0x48] sm:$0xff]
          %v1024 = vld [vmem:[%s1013 + $0x50] sm:$0xff]
          %v1025 = vld [vmem:[%s1013 + $0x58] sm:$0xff]
          %v1026 = vld [vmem:[%s1013 + $0x60] sm:$0xff]
          %v1027 = vld [vmem:[%s1013 + $0x68] sm:$0xff]
          %v1028 = vld [vmem:[%s1013 + $0x70] sm:$0xff]
          %v1029 = vld [vmem:[%s1013 + $0x78] sm:$0xff]
          %1030 = vmatpush.msra.mxu0 %v1029
          %1031 = vmatpush.msra.mxu0 %v1028
          %1032 = vmatpush.msra.mxu0 %v1027
          %1033 = vmatpush.msra.mxu0 %v1026
          %1034 = vmatpush.msra.mxu0 %v1025
          %1035 = vmatpush.msra.mxu0 %v1024
          %1036 = vmatpush.msra.mxu0 %v1023
          %1037 = vmatpush.msra.mxu0 %v1022
          %1038 = vmatpush.msra.mxu0 %v1021
          %1039 = vmatpush.msra.mxu0 %v1020
          %1040 = vmatpush.msra.mxu0 %v1019
          %1041 = vmatpush.msra.mxu0 %v1018
          %1042 = vmatpush.msra.mxu0 %v1017
          %1043 = vmatpush.msra.mxu0 %v1016
          %1044 = vmatpush.msra.mxu0 %v1015
          %1045 = vmatpush.msra.mxu0 %v1014
          %1046 = vmatmul.f32.gmra.mxu0 %v1012
          %v1047 = vpop.f32.mrf.mxu0
          %v1048 = vadd.f32 0.0, %v1047
          %1049 = vdwg.mxu0
          %v1050 = vadd.f32 %v1010, %v1048
          %v1051 = vld [vmem:[#allocation8] sm:$0x1]
          %v1053 = vperm.slane %v1051, 0
          %v1055 = vadd.f32 %v1050, %v1053
          %1056 = vst [vmem:[#allocation9] sm:$0x3] %v1055
        $region56: #{dvpp3d_forward.1} parent=35 // pred_fallthru
          _
        // Predicated region
        $region57: #{dvpp3d_forward.1} parent=35 // pred_check
          %p1057 = pneg %p146
        $region58: #{dvpp3d_forward.1} parent=35 // pred_check_branch
          %1059 = sbr.rel (%p1057) target = $region60
        $region59: #{dvpp3d_forward.1} parent=35 // pred_region
          %1061 = vsyncadd [#allocation5], 0
          %s1062 = smul.addr %s24, 2
          %s1063 = scalar_lea.hbm %s4, %s1062
          %s1065 = sshll.u32 [#allocation9], 4
          %s1066 = int_to_ptr.vmem [resolvable:$true] %s1065
          %s1067 = sshll.u32 %s1063, 4
          %s1068 = int_to_ptr.hbm [resolvable:$true] %s1067
          %1070 = dma.vmem_to_hbm [thread:$0]  %s1066, 32, %s1068, [#allocation5]
        $region60: #{dvpp3d_forward.1} parent=35 // pred_fallthru
          _
        // Predicated region
        $region61: #{dvpp3d_forward.1} parent=35 // pred_check
          %p1071 = pneg %p146
        $region62: #{dvpp3d_forward.1} parent=35 // pred_check_branch
          %1073 = sbr.rel (%p1071) target = $region64
        $region63: #{dvpp3d_forward.1} parent=35 // pred_region
          %1075 = dma.done [#allocation5], 32
        $region64: #{dvpp3d_forward.1} parent=35 // pred_fallthru
          _
      $region36: #{dvpp3d_forward.1} parent=5 // pred_fallthru
        _
      %p1076 = scmp.le.s32.totalorder 2, %s15
      // Predicated region
      $region65: #{dvpp3d_forward.1} parent=5 // pred_check
        %p1077 = pneg %p1076
      $region66: #{dvpp3d_forward.1} parent=5 // pred_check_branch
        %1079 = sbr.rel (%p1077) target = $region68
      $region67: #{dvpp3d_forward.1} parent=5 // pred_region
        %s1080 = ssub.s32 %s15, 2
      $region68: #{dvpp3d_forward.1} parent=5 // pred_fallthru
        _
    $region6: #{dvpp3d_forward.1} parent=1 // loop_footer
      %s19 = sadd.s32 1, %s15
    $region7: #{dvpp3d_forward.1} parent=1 // loop_footer_branch
      %14 = sbr.rel target = $region3
    $region8: #{dvpp3d_forward.1} parent=1 // loop_exit
      _
    %1081 = vsyncpa [#allocation4], 1
    %s1082 = scalar_lea.sflag [#allocation4], 1
    %1083 = vsyncpa %s1082, 1
    %1084 = vsyncpa [#allocation7], 1
    %1085 = vsyncpa [#allocation5], 1
    %s1086 = scalar_lea.sflag [#allocation5], 1
    %1087 = vsyncpa %s1086, 1

</llo_original>
